<compile_context>
chip_gen: v7x
topology: tpu7x:2x2x1
jax: 0.10.0
libtpu: 0.0.40
codegen_flags: <defaults>
</compile_context>

<pallas_src>
import jax
import jax.numpy as jnp
from jax.experimental import pallas as pl
from jax.experimental.pallas import tpu as pltpu


def _round_up(x, m):
    return (x + m - 1) // m * m


def mlp_kernel(x_ref, w1_ref, b1_ref, w2_ref, b2_ref, w3_ref, b3_ref, o_ref):
    """One batch tile. x_ref: (4, TB) -- batch on the lane axis."""
    x = x_ref[...]  # bf16 (or f32 if compute_dtype=f32)

    # fc1 + bias + ReLU: (128, 4) @ (4, TB) -> (128, TB), f32 accumulation.
    h1 = jnp.dot(w1_ref[...], x, preferred_element_type=jnp.float32)
    h1 = jnp.maximum(h1 + b1_ref[...], 0.0)

    # dropout(p=0.5): identity in eval mode.
    # TODO(synk): training-mode dropout would need pltpu.prng_seed +
    # pltpu.prng_random_bits masking with 1/(1-p) scaling.

    # fc2 + bias + ReLU: (64, 128) @ (128, TB) -> (64, TB). Feed the MXU the
    # weight dtype (bf16) for the activation; accumulate in f32.
    h2 = jnp.dot(w2_ref[...], h1.astype(w2_ref.dtype),
                 preferred_element_type=jnp.float32)
    h2 = jnp.maximum(h2 + b2_ref[...], 0.0)

    # fc3: N=1 -> VPU multiply + sublane reduce (f32); avoids an MXU pass.
    # w3_ref / b3_ref are already full-lane-width (pre-broadcast in wrapper).
    out = jnp.sum(h2 * w3_ref[...], axis=0, keepdims=True) + b3_ref[...]
    o_ref[...] = out.astype(o_ref.dtype)


def simple_nn_forward(x, params, *, max_tb=4096, compute_dtype=jnp.bfloat16):
    """x: (B, 4). params PyTorch-style: W1 (128,4), b1 (128,1), W2 (64,128),
    b2 (64,1), w3 (64,1) (= fc3.weight.T), b3 (1,1). Returns (B, 1) float32."""
    w1, b1, w2, b2, w3, b3 = params
    B = x.shape[0]

    # Batch tile sits on the lane axis -> multiple of 128. Big tiles amortize
    # per-step overhead; capping at ~half the batch guarantees >= 2 grid steps
    # whenever B > 128 so v7x's two TensorCores can both be used.
    half = _round_up(pl.cdiv(B, 2), 128) if B > 128 else 128
    TB = max(128, min(max_tb, half))
    B_pad = _round_up(B, TB)
    grid = (B_pad // TB,)

    # Layout plumbing: batch -> lanes, zero-pad to the tile boundary, cast MXU
    # operands. Padded columns compute ReLU(bias) garbage that is sliced off
    # below -- never read out[:, B:].
    # TODO(synk): for latency-critical paths emit x feature-major (4, B) from
    # the producer so this transpose+pad round trip disappears.
    xT = jnp.zeros((4, B_pad), compute_dtype).at[:, :B].set(x.T.astype(compute_dtype))

    w1c = w1.astype(compute_dtype)
    w2c = w2.astype(compute_dtype)
    b1f = b1.astype(jnp.float32)
    b2f = b2.astype(jnp.float32)
    # Pre-broadcast the tiny fc3 params to full lane width (one-time, resident).
    w3f = jnp.broadcast_to(w3.astype(jnp.float32), (w3.shape[0], TB))
    b3f = jnp.broadcast_to(b3.astype(jnp.float32), (1, TB))

    # Weights/biases: constant block index -> fetched once, VMEM-resident.
    def resident(a):
        return pl.BlockSpec(a.shape, lambda i: (0, 0))

    out = pl.pallas_call(
        mlp_kernel,
        out_shape=jax.ShapeDtypeStruct((1, B_pad), jnp.float32),
        grid=grid,
        in_specs=[
            pl.BlockSpec((4, TB), lambda i: (0, i)),  # streamed / double-buffered
            resident(w1c), resident(b1f),
            resident(w2c), resident(b2f),
            resident(w3f), resident(b3f),
        ],
        out_specs=pl.BlockSpec((1, TB), lambda i: (0, i)),  # lane-dense output
        compiler_params=pltpu.CompilerParams(
            dimension_semantics=("parallel",),  # megacore-shard batch tiles (v7x)
        ),
    )(xT, w1c, b1f, w2c, b2f, w3f, b3f)

    return out[:, :B].T  # back to (B, 1)


def init_params(key, dtype=jnp.float32):
    # Mimic PyTorch nn.Linear default init: U(-1/sqrt(fan_in), +1/sqrt(fan_in)).
    # Stored as W: (out, in); b: (out, 1); fc3 weight pre-transposed to (64, 1).
    dims = [(4, 128), (128, 64), (64, 1)]
    params = []
    keys = jax.random.split(key, 2 * len(dims))
    for i, (fin, fout) in enumerate(dims):
        bound = 1.0 / (fin ** 0.5)
        w = jax.random.uniform(keys[2 * i], (fout, fin), jnp.float32, -bound, bound)
        b = jax.random.uniform(keys[2 * i + 1], (fout, 1), jnp.float32, -bound, bound)
        params += [w.astype(dtype), b.astype(dtype)]
    w1, b1, w2, b2, w3, b3 = params
    return (w1, b1, w2, b2, w3.T, b3.T)  # w3 -> (64, 1), b3 -> (1, 1)


if __name__ == "__main__":
    key = jax.random.PRNGKey(0)
    k_x, k_p = jax.random.split(key)

    B = 300  # small demo batch: pads to 2 tiles of 256 lanes -> 2 grid steps
    x = jax.random.normal(k_x, (B, 4), dtype=jnp.float32)
    params = init_params(k_p)

    out = simple_nn_forward(x, params)
    out = jax.block_until_ready(out)

    # Reference in plain JAX, matching the kernel's numerics (bf16 MXU inputs,
    # f32 accumulation; eval mode so dropout = identity).
    w1, b1, w2, b2, w3, b3 = params
    xb, w1b, w2b = (a.astype(jnp.bfloat16) for a in (x, w1, w2))
    h1 = jnp.maximum(
        jnp.dot(xb, w1b.T, preferred_element_type=jnp.float32) + b1.T, 0.0)
    h2 = jnp.maximum(
        jnp.dot(h1.astype(jnp.bfloat16), w2b.T,
                preferred_element_type=jnp.float32) + b2.T, 0.0)
    ref = h2 @ w3 + b3.T

    assert out.shape == (B, 1)
    max_err = float(jnp.max(jnp.abs(out - ref)))
    assert jnp.allclose(out, ref, atol=2e-3, rtol=2e-3), max_err

    print("KERNEL_OK")
</pallas_src>

<mosaic_0001>
module attributes {stable_mosaic.version = 11 : i64} {
  func.func @mlp_kernel(%arg0: i32, %arg1: memref<4x256xbf16, #tpu.memory_space<vmem>>, %arg2: memref<128x4xbf16, #tpu.memory_space<vmem>>, %arg3: memref<128x1xf32, #tpu.memory_space<vmem>>, %arg4: memref<64x128xbf16, #tpu.memory_space<vmem>>, %arg5: memref<64x1xf32, #tpu.memory_space<vmem>>, %arg6: memref<64x256xf32, #tpu.memory_space<vmem>>, %arg7: memref<1x256xf32, #tpu.memory_space<vmem>>, %arg8: memref<1x256xf32, #tpu.memory_space<vmem>>) attributes {dimension_semantics = [#tpu.dimension_semantics<parallel>], iteration_bounds = array<i64: 2>, scalar_prefetch = 0 : i64, scratch_operands = 0 : i64, tpu.core_type = #tpu.core_type<tc>, window_params = [{transform_indices = @transform_0, window_bounds = array<i64: 4, 256>}, {pipeline_mode = #tpu.pipeline_mode<synchronous>, transform_indices = @transform_1, window_bounds = array<i64: 128, 4>}, {pipeline_mode = #tpu.pipeline_mode<synchronous>, transform_indices = @transform_2, window_bounds = array<i64: 128, 1>}, {pipeline_mode = #tpu.pipeline_mode<synchronous>, transform_indices = @transform_3, window_bounds = array<i64: 64, 128>}, {pipeline_mode = #tpu.pipeline_mode<synchronous>, transform_indices = @transform_4, window_bounds = array<i64: 64, 1>}, {pipeline_mode = #tpu.pipeline_mode<synchronous>, transform_indices = @transform_5, window_bounds = array<i64: 64, 256>}, {pipeline_mode = #tpu.pipeline_mode<synchronous>, transform_indices = @transform_6, window_bounds = array<i64: 1, 256>}, {transform_indices = @transform_7, window_bounds = array<i64: 1, 256>}]} {
    %c0 = arith.constant 0 : index
    %c0_0 = arith.constant 0 : index
    %0 = vector.load %arg1[%c0, %c0_0] : memref<4x256xbf16, #tpu.memory_space<vmem>>, vector<4x256xbf16>
    %c0_1 = arith.constant 0 : index
    %c0_2 = arith.constant 0 : index
    %1 = vector.load %arg2[%c0_1, %c0_2] : memref<128x4xbf16, #tpu.memory_space<vmem>>, vector<128x4xbf16>
    %cst = arith.constant dense<0.000000e+00> : vector<128x256xf32>
    %2 = tpu.matmul %1, %0, %cst {dimension_numbers = #tpu.dot_dimension_numbers<[1], [0], [0], [1], [0, 0, 1, 1], [], []>} : vector<128x4xbf16>, vector<4x256xbf16>, vector<128x256xf32> -> vector<128x256xf32>
    %c0_3 = arith.constant 0 : index
    %c0_4 = arith.constant 0 : index
    %3 = vector.load %arg3[%c0_3, %c0_4] : memref<128x1xf32, #tpu.memory_space<vmem>>, vector<128x1xf32>
    %4 = vector.broadcast %3 : vector<128x1xf32> to vector<128x256xf32>
    %5 = arith.addf %2, %4 : vector<128x256xf32>
    %cst_5 = arith.constant 0.000000e+00 : f32
    %6 = vector.broadcast %cst_5 : f32 to vector<128x256xf32>
    %7 = arith.maximumf %5, %6 : vector<128x256xf32>
    %c0_6 = arith.constant 0 : index
    %c0_7 = arith.constant 0 : index
    %8 = vector.load %arg4[%c0_6, %c0_7] : memref<64x128xbf16, #tpu.memory_space<vmem>>, vector<64x128xbf16>
    %9 = arith.truncf %7 : vector<128x256xf32> to vector<128x256xbf16>
    %cst_8 = arith.constant dense<0.000000e+00> : vector<64x256xf32>
    %10 = tpu.matmul %8, %9, %cst_8 {dimension_numbers = #tpu.dot_dimension_numbers<[1], [0], [0], [1], [0, 0, 1, 1], [], []>} : vector<64x128xbf16>, vector<128x256xbf16>, vector<64x256xf32> -> vector<64x256xf32>
    %c0_9 = arith.constant 0 : index
    %c0_10 = arith.constant 0 : index
    %11 = vector.load %arg5[%c0_9, %c0_10] : memref<64x1xf32, #tpu.memory_space<vmem>>, vector<64x1xf32>
    %12 = vector.broadcast %11 : vector<64x1xf32> to vector<64x256xf32>
    %13 = arith.addf %10, %12 : vector<64x256xf32>
    %cst_11 = arith.constant 0.000000e+00 : f32
    %14 = vector.broadcast %cst_11 : f32 to vector<64x256xf32>
    %15 = arith.maximumf %13, %14 : vector<64x256xf32>
    %c0_12 = arith.constant 0 : index
    %c0_13 = arith.constant 0 : index
    %16 = vector.load %arg6[%c0_12, %c0_13] : memref<64x256xf32, #tpu.memory_space<vmem>>, vector<64x256xf32>
    %17 = arith.mulf %15, %16 : vector<64x256xf32>
    %cst_14 = arith.constant dense<0.000000e+00> : vector<256xf32>
    %18 = vector.multi_reduction <add>, %17, %cst_14 [0] : vector<64x256xf32> to vector<256xf32>
    %19 = vector.shape_cast %18 : vector<256xf32> to vector<1x256xf32>
    %c0_15 = arith.constant 0 : index
    %c0_16 = arith.constant 0 : index
    %20 = vector.load %arg7[%c0_15, %c0_16] : memref<1x256xf32, #tpu.memory_space<vmem>>, vector<1x256xf32>
    %21 = arith.addf %19, %20 : vector<1x256xf32>
    %c0_17 = arith.constant 0 : index
    %c0_18 = arith.constant 0 : index
    %22 = vector.load %arg8[%c0_17, %c0_18] : memref<1x256xf32, #tpu.memory_space<vmem>>, vector<1x256xf32>
    tpu.vector_store %arg8[%c0_17, %c0_18], %21 {strides = array<i32>} : memref<1x256xf32, #tpu.memory_space<vmem>>, vector<1x256xf32>,
    return
  }
  func.func @transform_0(%arg0: i32) -> (i32, i32) {
    %c0_i32 = arith.constant 0 : i32
    %c0_i32_0 = arith.constant 0 : i32
    return %c0_i32, %arg0 : i32, i32
  }
  func.func @transform_1(%arg0: i32) -> (i32, i32) {
    %c0_i32 = arith.constant 0 : i32
    %c0_i32_0 = arith.constant 0 : i32
    %c0_i32_1 = arith.constant 0 : i32
    return %c0_i32, %c0_i32_0 : i32, i32
  }
  func.func @transform_2(%arg0: i32) -> (i32, i32) {
    %c0_i32 = arith.constant 0 : i32
    %c0_i32_0 = arith.constant 0 : i32
    %c0_i32_1 = arith.constant 0 : i32
    return %c0_i32, %c0_i32_0 : i32, i32
  }
  func.func @transform_3(%arg0: i32) -> (i32, i32) {
    %c0_i32 = arith.constant 0 : i32
    %c0_i32_0 = arith.constant 0 : i32
    %c0_i32_1 = arith.constant 0 : i32
    return %c0_i32, %c0_i32_0 : i32, i32
  }
  func.func @transform_4(%arg0: i32) -> (i32, i32) {
    %c0_i32 = arith.constant 0 : i32
    %c0_i32_0 = arith.constant 0 : i32
    %c0_i32_1 = arith.constant 0 : i32
    return %c0_i32, %c0_i32_0 : i32, i32
  }
  func.func @transform_5(%arg0: i32) -> (i32, i32) {
    %c0_i32 = arith.constant 0 : i32
    %c0_i32_0 = arith.constant 0 : i32
    %c0_i32_1 = arith.constant 0 : i32
    return %c0_i32, %c0_i32_0 : i32, i32
  }
  func.func @transform_6(%arg0: i32) -> (i32, i32) {
    %c0_i32 = arith.constant 0 : i32
    %c0_i32_0 = arith.constant 0 : i32
    %c0_i32_1 = arith.constant 0 : i32
    return %c0_i32, %c0_i32_0 : i32, i32
  }
  func.func @transform_7(%arg0: i32) -> (i32, i32) {
    %c0_i32 = arith.constant 0 : i32
    %c0_i32_0 = arith.constant 0 : i32
    return %c0_i32, %arg0 : i32, i32
  }
}

</mosaic_0001>

<llo_original>
// kernel: tpu_custom_call.1
$region0: #{tpu_custom_call.1}
  #allocation0 [shape = 'u32[]', space=smem, size = 0x4, offset = 0x4, fixed_abs, tag = 'smem constant byte address 0x4 - core index']
  #allocation1 [shape = 'u32[144,128]{1,0:T(1,128)}', space=vmem, size = 0x12000, scoped, tag = 'internal scratch']
  %s0 = inlined_call_operand.vmem [shape: bf16[4,512], index: 0, kind: input, shape index: {}]
  %s1 = inlined_call_operand.vmem [shape: bf16[128,4], index: 1, kind: input, shape index: {}]
  %s2 = inlined_call_operand.vmem [shape: f32[128,1], index: 2, kind: input, shape index: {}]
  %s3 = inlined_call_operand.vmem [shape: bf16[64,128], index: 3, kind: input, shape index: {}]
  %s4 = inlined_call_operand.vmem [shape: f32[64,1], index: 4, kind: input, shape index: {}]
  %s5 = inlined_call_operand.vmem [shape: f32[64,256], index: 5, kind: input, shape index: {}]
  %s6 = inlined_call_operand.vmem [shape: f32[1,256], index: 6, kind: input, shape index: {}]
  %s7 = inlined_call_operand.hbm [shape: f32[1,512], index: 7, kind: output, shape index: {}]
  %s8 = sld [smem:[#allocation0]]
  $region61: #{tpu_custom_call.1} parent=0
    _
  %s10 = ssub.s32 1, %s8
  %s11 = scalar_select 0, %s10, %s8
  $region1: #{tpu_custom_call.1} parent=0
    #allocation2 [shape = 'u8[2048]{0}', space=vmem, size = 0x800, scoped, tag = 'output window, operand 0']
    #allocation3 [shape = 's32[2]{0}', space=sflag, size = 0x8, scoped, tag = 'scoped memory for tpu_custom_call.1']
    %12 = vsyncpa [#allocation3], 0
    %s13 = scalar_lea.sflag [#allocation3], 1
    %14 = vsyncpa %s13, 0
    loop: start=0, step=1, limit=4
    $region2: #{tpu_custom_call.1} parent=1 // loop_pre_header
      _
    $region3: #{tpu_custom_call.1} parent=1 // loop_header
      %s16 = sphi 0, %s20
      %p17 = scmp.ge.s32.totalorder %s16, 4
      %s26 = sphi 0, %s28
      %s29 = sphi 0, %s26
      %s30 = sphi 0, %s29
      %s46 = sphi 0, %s30
      %s50 = sphi 0, %s50
      %s52 = sphi 0, %s50
      %s53 = sphi 0, %s52
      %s67 = sphi 0, %s53
      %s71 = sphi 0, %s71
      %s73 = sphi 0, %s71
      %s74 = sphi 0, %s73
      %s88 = sphi 0, %s74
      %s92 = sphi 0, %s92
      %s94 = sphi 0, %s92
      %s95 = sphi 0, %s94
      %s109 = sphi 0, %s95
      %s113 = sphi 0, %s113
      %s115 = sphi 0, %s113
      %s116 = sphi 0, %s115
      %s130 = sphi 0, %s116
      %s134 = sphi 0, %s134
      %s136 = sphi 0, %s134
      %s137 = sphi 0, %s136
      %s151 = sphi 0, %s137
      %s155 = sphi 0, %s155
      %s157 = sphi 0, %s155
      %s158 = sphi 0, %s157
      %s172 = sphi 0, %s158
      %s178 = sphi 0, %s180
      %s181 = sphi 0, %s178
      %s182 = sphi 0, %s181
      %s198 = sphi 0, %s182
    $region4: #{tpu_custom_call.1} parent=1 // loop_header_branch
      %19 = sbr.rel (%p17) target = $region8
    $region5: #{tpu_custom_call.1} parent=1 // loop_body
      %s21 = ssub.s32 %s16, 1
      %s22 = ssub.s32 %s16, 2
      %s23 = sadd.s32 %s16, 1
      %s24 = ssub.s32 %s16, %s23
      %p25 = scmp.eq.s32.totalorder %s24, 0
      %s27 = sadd.s32 %s26, 1
      %s28 = scalar_select %p25, %s26, %s27
      %p31 = pneg %p25
      %p32 = scmp.eq.s32.totalorder %s16, 1
      %p33 = por %p31, %p32
      %p34 = scmp.ne.s32.totalorder %s26, %s29
      %p35 = scmp.eq.s32.totalorder %s16, 0
      %p36 = por %p34, %p35
      %p37 = scmp.ne.s32.totalorder %s26, %s29
      %p38 = scmp.eq.s32.totalorder %s21, 1
      %p39 = por %p37, %p38
      %p40 = scmp.ne.s32.totalorder %s29, %s30
      %p41 = scmp.eq.s32.totalorder %s21, 0
      %p42 = por %p40, %p41
      %p43 = scmp.ne.s32.totalorder %s29, %s30
      %p44 = scmp.eq.s32.totalorder %s22, 1
      %p45 = por %p43, %p44
      %p47 = scmp.ne.s32.totalorder %s30, %s46
      %p48 = scmp.eq.s32.totalorder %s22, 0
      %p49 = por %p47, %p48
      %s51 = sadd.s32 %s50, 1
      %p54 = scmp.eq.s32.totalorder %s16, 1
      %p55 = scmp.ne.s32.totalorder %s50, %s52
      %p56 = scmp.eq.s32.totalorder %s16, 0
      %p57 = por %p55, %p56
      %p58 = scmp.ne.s32.totalorder %s50, %s52
      %p59 = scmp.eq.s32.totalorder %s21, 1
      %p60 = por %p58, %p59
      %p61 = scmp.ne.s32.totalorder %s52, %s53
      %p62 = scmp.eq.s32.totalorder %s21, 0
      %p63 = por %p61, %p62
      %p64 = scmp.ne.s32.totalorder %s52, %s53
      %p65 = scmp.eq.s32.totalorder %s22, 1
      %p66 = por %p64, %p65
      %p68 = scmp.ne.s32.totalorder %s53, %s67
      %p69 = scmp.eq.s32.totalorder %s22, 0
      %p70 = por %p68, %p69
      %s72 = sadd.s32 %s71, 1
      %p75 = scmp.eq.s32.totalorder %s16, 1
      %p76 = scmp.ne.s32.totalorder %s71, %s73
      %p77 = scmp.eq.s32.totalorder %s16, 0
      %p78 = por %p76, %p77
      %p79 = scmp.ne.s32.totalorder %s71, %s73
      %p80 = scmp.eq.s32.totalorder %s21, 1
      %p81 = por %p79, %p80
      %p82 = scmp.ne.s32.totalorder %s73, %s74
      %p83 = scmp.eq.s32.totalorder %s21, 0
      %p84 = por %p82, %p83
      %p85 = scmp.ne.s32.totalorder %s73, %s74
      %p86 = scmp.eq.s32.totalorder %s22, 1
      %p87 = por %p85, %p86
      %p89 = scmp.ne.s32.totalorder %s74, %s88
      %p90 = scmp.eq.s32.totalorder %s22, 0
      %p91 = por %p89, %p90
      %s93 = sadd.s32 %s92, 1
      %p96 = scmp.eq.s32.totalorder %s16, 1
      %p97 = scmp.ne.s32.totalorder %s92, %s94
      %p98 = scmp.eq.s32.totalorder %s16, 0
      %p99 = por %p97, %p98
      %p100 = scmp.ne.s32.totalorder %s92, %s94
      %p101 = scmp.eq.s32.totalorder %s21, 1
      %p102 = por %p100, %p101
      %p103 = scmp.ne.s32.totalorder %s94, %s95
      %p104 = scmp.eq.s32.totalorder %s21, 0
      %p105 = por %p103, %p104
      %p106 = scmp.ne.s32.totalorder %s94, %s95
      %p107 = scmp.eq.s32.totalorder %s22, 1
      %p108 = por %p106, %p107
      %p110 = scmp.ne.s32.totalorder %s95, %s109
      %p111 = scmp.eq.s32.totalorder %s22, 0
      %p112 = por %p110, %p111
      %s114 = sadd.s32 %s113, 1
      %p117 = scmp.eq.s32.totalorder %s16, 1
      %p118 = scmp.ne.s32.totalorder %s113, %s115
      %p119 = scmp.eq.s32.totalorder %s16, 0
      %p120 = por %p118, %p119
      %p121 = scmp.ne.s32.totalorder %s113, %s115
      %p122 = scmp.eq.s32.totalorder %s21, 1
      %p123 = por %p121, %p122
      %p124 = scmp.ne.s32.totalorder %s115, %s116
      %p125 = scmp.eq.s32.totalorder %s21, 0
      %p126 = por %p124, %p125
      %p127 = scmp.ne.s32.totalorder %s115, %s116
      %p128 = scmp.eq.s32.totalorder %s22, 1
      %p129 = por %p127, %p128
      %p131 = scmp.ne.s32.totalorder %s116, %s130
      %p132 = scmp.eq.s32.totalorder %s22, 0
      %p133 = por %p131, %p132
      %s135 = sadd.s32 %s134, 1
      %p138 = scmp.eq.s32.totalorder %s16, 1
      %p139 = scmp.ne.s32.totalorder %s134, %s136
      %p140 = scmp.eq.s32.totalorder %s16, 0
      %p141 = por %p139, %p140
      %p142 = scmp.ne.s32.totalorder %s134, %s136
      %p143 = scmp.eq.s32.totalorder %s21, 1
      %p144 = por %p142, %p143
      %p145 = scmp.ne.s32.totalorder %s136, %s137
      %p146 = scmp.eq.s32.totalorder %s21, 0
      %p147 = por %p145, %p146
      %p148 = scmp.ne.s32.totalorder %s136, %s137
      %p149 = scmp.eq.s32.totalorder %s22, 1
      %p150 = por %p148, %p149
      %p152 = scmp.ne.s32.totalorder %s137, %s151
      %p153 = scmp.eq.s32.totalorder %s22, 0
      %p154 = por %p152, %p153
      %s156 = sadd.s32 %s155, 1
      %p159 = scmp.eq.s32.totalorder %s16, 1
      %p160 = scmp.ne.s32.totalorder %s155, %s157
      %p161 = scmp.eq.s32.totalorder %s16, 0
      %p162 = por %p160, %p161
      %p163 = scmp.ne.s32.totalorder %s155, %s157
      %p164 = scmp.eq.s32.totalorder %s21, 1
      %p165 = por %p163, %p164
      %p166 = scmp.ne.s32.totalorder %s157, %s158
      %p167 = scmp.eq.s32.totalorder %s21, 0
      %p168 = por %p166, %p167
      %p169 = scmp.ne.s32.totalorder %s157, %s158
      %p170 = scmp.eq.s32.totalorder %s22, 1
      %p171 = por %p169, %p170
      %p173 = scmp.ne.s32.totalorder %s158, %s172
      %p174 = scmp.eq.s32.totalorder %s22, 0
      %p175 = por %p173, %p174
      %s176 = ssub.s32 %s16, %s23
      %p177 = scmp.eq.s32.totalorder %s176, 0
      %s179 = sadd.s32 %s178, 1
      %s180 = scalar_select %p177, %s178, %s179
      %p183 = pneg %p177
      %p184 = scmp.eq.s32.totalorder %s16, 1
      %p185 = por %p183, %p184
      %p186 = scmp.ne.s32.totalorder %s178, %s181
      %p187 = scmp.eq.s32.totalorder %s16, 0
      %p188 = por %p186, %p187
      %p189 = scmp.ne.s32.totalorder %s178, %s181
      %p190 = scmp.eq.s32.totalorder %s21, 1
      %p191 = por %p189, %p190
      %p192 = scmp.ne.s32.totalorder %s181, %s182
      %p193 = scmp.eq.s32.totalorder %s21, 0
      %p194 = por %p192, %p193
      %p195 = scmp.ne.s32.totalorder %s181, %s182
      %p196 = scmp.eq.s32.totalorder %s22, 1
      %p197 = por %p195, %p196
      %p199 = scmp.ne.s32.totalorder %s182, %s198
      %p200 = scmp.eq.s32.totalorder %s22, 0
      %p201 = por %p199, %p200
      %p202 = scmp.le.s32.totalorder 1, %s16
      %p203 = scmp.lt.s32.totalorder %s16, 3
      %p204 = pnand %p202, %p203
      %p205 = pneg %p204
      // Predicated region
      $region9: #{tpu_custom_call.1} parent=5 // pred_check
        _
      $region10: #{tpu_custom_call.1} parent=5 // pred_check_branch
        %207 = sbr.rel (%p204) target = $region12
      $region11: #{tpu_custom_call.1} parent=5 // pred_region
        %s208 = ssub.s32 %s16, 1
        // Predicated region
        $region13: #{tpu_custom_call.1} parent=11 // pred_check
          %p209 = pneg %p63
        $region14: #{tpu_custom_call.1} parent=11 // pred_check_branch
          %211 = sbr.rel (%p209) target = $region16
        $region15: #{tpu_custom_call.1} parent=11 // pred_region
          _
        $region16: #{tpu_custom_call.1} parent=11 // pred_fallthru
          _
        // Predicated region
        $region17: #{tpu_custom_call.1} parent=11 // pred_check
          %p212 = pneg %p84
        $region18: #{tpu_custom_call.1} parent=11 // pred_check_branch
          %214 = sbr.rel (%p212) target = $region20
        $region19: #{tpu_custom_call.1} parent=11 // pred_region
          _
        $region20: #{tpu_custom_call.1} parent=11 // pred_fallthru
          _
        // Predicated region
        $region21: #{tpu_custom_call.1} parent=11 // pred_check
          %p215 = pneg %p105
        $region22: #{tpu_custom_call.1} parent=11 // pred_check_branch
          %217 = sbr.rel (%p215) target = $region24
        $region23: #{tpu_custom_call.1} parent=11 // pred_region
          _
        $region24: #{tpu_custom_call.1} parent=11 // pred_fallthru
          _
        // Predicated region
        $region25: #{tpu_custom_call.1} parent=11 // pred_check
          %p218 = pneg %p126
        $region26: #{tpu_custom_call.1} parent=11 // pred_check_branch
          %220 = sbr.rel (%p218) target = $region28
        $region27: #{tpu_custom_call.1} parent=11 // pred_region
          _
        $region28: #{tpu_custom_call.1} parent=11 // pred_fallthru
          _
        // Predicated region
        $region29: #{tpu_custom_call.1} parent=11 // pred_check
          %p221 = pneg %p147
        $region30: #{tpu_custom_call.1} parent=11 // pred_check_branch
          %223 = sbr.rel (%p221) target = $region32
        $region31: #{tpu_custom_call.1} parent=11 // pred_region
          _
        $region32: #{tpu_custom_call.1} parent=11 // pred_fallthru
          _
        // Predicated region
        $region33: #{tpu_custom_call.1} parent=11 // pred_check
          %p224 = pneg %p168
        $region34: #{tpu_custom_call.1} parent=11 // pred_check_branch
          %226 = sbr.rel (%p224) target = $region36
        $region35: #{tpu_custom_call.1} parent=11 // pred_region
          _
        $region36: #{tpu_custom_call.1} parent=11 // pred_fallthru
          _
      $region12: #{tpu_custom_call.1} parent=5 // pred_fallthru
        _
      %p227 = scmp.lt.s32.totalorder %s16, 2
      // Predicated region
      $region37: #{tpu_custom_call.1} parent=5 // pred_check
        %p228 = pneg %p227
      $region38: #{tpu_custom_call.1} parent=5 // pred_check_branch
        %230 = sbr.rel (%p228) target = $region40
      $region39: #{tpu_custom_call.1} parent=5 // pred_region
        // Predicated region
        $region41: #{tpu_custom_call.1} parent=39 // pred_check
          %p231 = pneg %p36
        $region42: #{tpu_custom_call.1} parent=39 // pred_check_branch
          %233 = sbr.rel (%p231) target = $region44
        $region43: #{tpu_custom_call.1} parent=39 // pred_region
          %s234 = smul.u32 2, %s16
          %p235 = scmp.lt.s32.totalorder %s234, 3
          %s236 = scalar_select %p235, %s234, 3
          %s237 = smul.addr %s236, 2
          %s238 = scalar_lea.vmem %s0, %s237
          %s239 = smul.u32 2, %s16
        $region44: #{tpu_custom_call.1} parent=39 // pred_fallthru
          _
      $region40: #{tpu_custom_call.1} parent=5 // pred_fallthru
        _
      %p240 = scmp.le.s32.totalorder 1, %s16
      %p241 = scmp.lt.s32.totalorder %s16, 3
      %p242 = pnand %p240, %p241
      %p243 = pneg %p242
      // Predicated region
      $region45: #{tpu_custom_call.1} parent=5 // pred_check
        _
      $region46: #{tpu_custom_call.1} parent=5 // pred_check_branch
        %245 = sbr.rel (%p242) target = $region48
      $region47: #{tpu_custom_call.1} parent=5 // pred_region
        %s246 = ssub.s32 %s16, 1
        %s247 = smul.u32 2, %s21
        %p248 = scmp.lt.s32.totalorder %s247, 3
        %s249 = scalar_select %p248, %s247, 3
        %s250 = smul.addr %s249, 2
        %s251 = scalar_lea.vmem %s0, %s250
        %p252 = pneg %p42
        %p253 = pneg %p39
        %p254 = pneg %p63
        %p255 = pneg %p60
        %p256 = pneg %p84
        %p257 = pneg %p81
        %p258 = pneg %p105
        %p259 = pneg %p102
        %p260 = pneg %p126
        %p261 = pneg %p123
        %p262 = pneg %p147
        %p263 = pneg %p144
        %p264 = pneg %p168
        %p265 = pneg %p165
        %p266 = pneg %p194
        %p267 = pneg %p191
        %s268 = sand.u32 %s181, 1
        %s269 = scalar_lea.sflag [#allocation3], %s268
        %s270 = sand.u32 %s181, 1
        %s271 = smul.addr %s270, 2
        %s272 = scalar_lea.vmem [#allocation2], %s271
        %s273 = smul.u32 2, %s21
        %p274 = scmp.lt.s32.totalorder %s273, 3
        %s275 = scalar_select %p274, %s273, 3
        %s276 = smul.addr %s275, 2
        %s277 = scalar_lea.vmem %s0, %s276
        %s278 = smul.u32 2, %s21
        %s279 = smul.u32 2, %s21
        %v281 = vld [vmem:[%s277] sm:$0xf]
        %v282 = vld [vmem:[%s1] sm:$0xf]
        %v283 = vld [vmem:[%s1 + $0x4] sm:$0xf]
        %v284 = vld [vmem:[%s1 + $0x8] sm:$0xf]
        %v285 = vld [vmem:[%s1 + $0xc] sm:$0xf]
        %v286 = vld [vmem:[%s1 + $0x10] sm:$0xf]
        %v287 = vld [vmem:[%s1 + $0x14] sm:$0xf]
        %v288 = vld [vmem:[%s1 + $0x18] sm:$0xf]
        %v289 = vld [vmem:[%s1 + $0x1c] sm:$0xf]
        %v290 = vld [vmem:[%s1 + $0x20] sm:$0xf]
        %v291 = vld [vmem:[%s1 + $0x24] sm:$0xf]
        %v292 = vld [vmem:[%s1 + $0x28] sm:$0xf]
        %v293 = vld [vmem:[%s1 + $0x2c] sm:$0xf]
        %v294 = vld [vmem:[%s1 + $0x30] sm:$0xf]
        %v295 = vld [vmem:[%s1 + $0x34] sm:$0xf]
        %v296 = vld [vmem:[%s1 + $0x38] sm:$0xf]
        %v297 = vld [vmem:[%s1 + $0x3c] sm:$0xf]
        %v298 = vld [vmem:[%s2] sm:$0xff]
        %v299 = vld [vmem:[%s2 + $0x8] sm:$0xff]
        %v300 = vld [vmem:[%s2 + $0x10] sm:$0xff]
        %v301 = vld [vmem:[%s2 + $0x18] sm:$0xff]
        %v302 = vld [vmem:[%s2 + $0x20] sm:$0xff]
        %v303 = vld [vmem:[%s2 + $0x28] sm:$0xff]
        %v304 = vld [vmem:[%s2 + $0x30] sm:$0xff]
        %v305 = vld [vmem:[%s2 + $0x38] sm:$0xff]
        %v306 = vld [vmem:[%s2 + $0x40] sm:$0xff]
        %v307 = vld [vmem:[%s2 + $0x48] sm:$0xff]
        %v308 = vld [vmem:[%s2 + $0x50] sm:$0xff]
        %v309 = vld [vmem:[%s2 + $0x58] sm:$0xff]
        %v310 = vld [vmem:[%s2 + $0x60] sm:$0xff]
        %v311 = vld [vmem:[%s2 + $0x68] sm:$0xff]
        %v312 = vld [vmem:[%s2 + $0x70] sm:$0xff]
        %v313 = vld [vmem:[%s2 + $0x78] sm:$0xff]
        %315 = vset.pattern.permute.xlu0 0
        %316 = vperm.xlu0 %315, %v298
        %v317 = vpop.permute.xlu0 %316
        %320 = vset.pattern.permute.xlu0 0
        %321 = vperm.xlu0 %320, %v299
        %v322 = vpop.permute.xlu0 %321
        %325 = vset.pattern.permute.xlu0 0
        %326 = vperm.xlu0 %325, %v300
        %v327 = vpop.permute.xlu0 %326
        %330 = vset.pattern.permute.xlu0 0
        %331 = vperm.xlu0 %330, %v301
        %v332 = vpop.permute.xlu0 %331
        %335 = vset.pattern.permute.xlu0 0
        %336 = vperm.xlu0 %335, %v302
        %v337 = vpop.permute.xlu0 %336
        %340 = vset.pattern.permute.xlu0 0
        %341 = vperm.xlu0 %340, %v303
        %v342 = vpop.permute.xlu0 %341
        %345 = vset.pattern.permute.xlu0 0
        %346 = vperm.xlu0 %345, %v304
        %v347 = vpop.permute.xlu0 %346
        %350 = vset.pattern.permute.xlu0 0
        %351 = vperm.xlu0 %350, %v305
        %v352 = vpop.permute.xlu0 %351
        %355 = vset.pattern.permute.xlu0 0
        %356 = vperm.xlu0 %355, %v306
        %v357 = vpop.permute.xlu0 %356
        %360 = vset.pattern.permute.xlu0 0
        %361 = vperm.xlu0 %360, %v307
        %v362 = vpop.permute.xlu0 %361
        %365 = vset.pattern.permute.xlu0 0
        %366 = vperm.xlu0 %365, %v308
        %v367 = vpop.permute.xlu0 %366
        %370 = vset.pattern.permute.xlu0 0
        %371 = vperm.xlu0 %370, %v309
        %v372 = vpop.permute.xlu0 %371
        %375 = vset.pattern.permute.xlu0 0
        %376 = vperm.xlu0 %375, %v310
        %v377 = vpop.permute.xlu0 %376
        %380 = vset.pattern.permute.xlu0 0
        %381 = vperm.xlu0 %380, %v311
        %v382 = vpop.permute.xlu0 %381
        %385 = vset.pattern.permute.xlu0 0
        %386 = vperm.xlu0 %385, %v312
        %v387 = vpop.permute.xlu0 %386
        %390 = vset.pattern.permute.xlu0 0
        %391 = vperm.xlu0 %390, %v313
        %v392 = vpop.permute.xlu0 %391
        %v410 = vunpack.c.l.b16 %v282
        %v411 = vunpack.c.l.b16 %v283
        %v412 = vunpack.c.l.b16 %v284
        %v413 = vunpack.c.l.b16 %v285
        %v414 = vunpack.c.l.b16 %v286
        %v415 = vunpack.c.l.b16 %v287
        %v416 = vunpack.c.l.b16 %v288
        %v417 = vunpack.c.l.b16 %v289
        %v418 = vunpack.c.l.b16 %v290
        %v419 = vunpack.c.l.b16 %v291
        %v420 = vunpack.c.l.b16 %v292
        %v421 = vunpack.c.l.b16 %v293
        %v422 = vunpack.c.l.b16 %v294
        %v423 = vunpack.c.l.b16 %v295
        %v424 = vunpack.c.l.b16 %v296
        %v425 = vunpack.c.l.b16 %v297
        %v426 = vpack.c.b16 %v411, %v410
        %v427 = vpack.c.b16 %v413, %v412
        %v428 = vpack.c.b16 %v415, %v414
        %v429 = vpack.c.b16 %v417, %v416
        %v430 = vpack.c.b16 %v419, %v418
        %v431 = vpack.c.b16 %v421, %v420
        %v432 = vpack.c.b16 %v423, %v422
        %v433 = vpack.c.b16 %v425, %v424
        %v436 = vunpack.c.l.s4 1983009808
        %v437 = vunpack.c.0.s8 %v436
        %v438 = vlaneseq
        %v439 = vshrl.u32 %v438, 7
        %v440 = vsub.s32 %v437, %v439
        %v441 = vrot.slane %v281, %v440
        %v442 = vcombine.high %v441, %v441
        %vm443 = vcmask 31744
        %v445 = vsel %vm443, %v426, 0
        %v448 = vsel %vm443, %v427, 0
        %v451 = vsel %vm443, %v428, 0
        %v454 = vsel %vm443, %v429, 0
        %v457 = vsel %vm443, %v430, 0
        %v460 = vsel %vm443, %v431, 0
        %v463 = vsel %vm443, %v432, 0
        %v466 = vsel %vm443, %v433, 0
        %vm468 = vcmask 1041408
        %v470 = vsel %vm468, %v441, 0
        %v473 = vsel %vm468, %v442, 0
        %475 = vmatprep.subr.bf16.mxu0 %v473
        %476 = vmatpush1.bf16.msra.mxu0 %v470
        %477 = vmatprep.subr.bf16.mxu0 0
        %478 = vmatpush1.bf16.msra.mxu0 0
        %479 = vmatprep.subr.bf16.mxu0 0
        %480 = vmatpush1.bf16.msra.mxu0 0
        %481 = vmatprep.subr.bf16.mxu0 0
        %482 = vmatpush1.bf16.msra.mxu0 0
        %483 = vmatprep.subr.bf16.mxu0 0
        %484 = vmatpush1.bf16.msra.mxu0 0
        %485 = vmatprep.subr.bf16.mxu0 0
        %486 = vmatpush1.bf16.msra.mxu0 0
        %487 = vmatprep.subr.bf16.mxu0 0
        %488 = vmatpush1.bf16.msra.mxu0 0
        %489 = vmatprep.subr.bf16.mxu0 0
        %490 = vmatpush1.bf16.msra.mxu0 0
        %491 = vmatprep.subr.bf16.mxu0 0
        %492 = vmatpush1.bf16.msra.mxu0 0
        %493 = vmatprep.subr.bf16.mxu0 0
        %494 = vmatpush1.bf16.msra.mxu0 0
        %495 = vmatprep.subr.bf16.mxu0 0
        %496 = vmatpush1.bf16.msra.mxu0 0
        %497 = vmatprep.subr.bf16.mxu0 0
        %498 = vmatpush1.bf16.msra.mxu0 0
        %499 = vmatprep.subr.bf16.mxu0 0
        %500 = vmatpush1.bf16.msra.mxu0 0
        %501 = vmatprep.subr.bf16.mxu0 0
        %502 = vmatpush1.bf16.msra.mxu0 0
        %503 = vmatprep.subr.bf16.mxu0 0
        %504 = vmatpush1.bf16.msra.mxu0 0
        %505 = vmatprep.subr.bf16.mxu0 0
        %506 = vmatpush1.bf16.msra.mxu0 0
        %507 = vmatprep.mubr.bf16.mxu0 0
        %508 = vmatmul.mubr.bf16.gmra.mrb[0].mxu0 %v445
        %v509 = vpop.f32.mrb[0].mxu0
        %v510 = vadd.f32 %v317, %v509
        %v511 = vpop.f32.mrb[0].mxu0
        %v512 = vadd.f32 %v317, %v511
        %v513 = vpop.f32.mrb[0].mxu0
        %v514 = vadd.f32 %v322, %v513
        %v515 = vpop.f32.mrb[0].mxu0
        %v516 = vadd.f32 %v322, %v515
        %517 = vmatprep.mubr.bf16.mxu0 0
        %518 = vmatmul.mubr.bf16.gmra.mrb[0].mxu0 %v448
        %v519 = vpop.f32.mrb[0].mxu0
        %v520 = vadd.f32 %v327, %v519
        %v521 = vpop.f32.mrb[0].mxu0
        %v522 = vadd.f32 %v327, %v521
        %v523 = vpop.f32.mrb[0].mxu0
        %v524 = vadd.f32 %v332, %v523
        %v525 = vpop.f32.mrb[0].mxu0
        %v526 = vadd.f32 %v332, %v525
        %527 = vmatprep.mubr.bf16.mxu0 0
        %528 = vmatmul.mubr.bf16.gmra.mrb[0].mxu0 %v451
        %v529 = vpop.f32.mrb[0].mxu0
        %v530 = vadd.f32 %v337, %v529
        %v531 = vpop.f32.mrb[0].mxu0
        %v532 = vadd.f32 %v337, %v531
        %v533 = vpop.f32.mrb[0].mxu0
        %v534 = vadd.f32 %v342, %v533
        %v535 = vpop.f32.mrb[0].mxu0
        %v536 = vadd.f32 %v342, %v535
        %537 = vmatprep.mubr.bf16.mxu0 0
        %538 = vmatmul.mubr.bf16.gmra.mrb[0].mxu0 %v454
        %v539 = vpop.f32.mrb[0].mxu0
        %v540 = vadd.f32 %v347, %v539
        %v541 = vpop.f32.mrb[0].mxu0
        %v542 = vadd.f32 %v347, %v541
        %v543 = vpop.f32.mrb[0].mxu0
        %v544 = vadd.f32 %v352, %v543
        %v545 = vpop.f32.mrb[0].mxu0
        %v546 = vadd.f32 %v352, %v545
        %547 = vmatprep.mubr.bf16.mxu0 0
        %548 = vmatmul.mubr.bf16.gmra.mrb[0].mxu0 %v457
        %v549 = vpop.f32.mrb[0].mxu0
        %v550 = vadd.f32 %v357, %v549
        %v551 = vpop.f32.mrb[0].mxu0
        %v552 = vadd.f32 %v357, %v551
        %v553 = vpop.f32.mrb[0].mxu0
        %v554 = vadd.f32 %v362, %v553
        %v555 = vpop.f32.mrb[0].mxu0
        %v556 = vadd.f32 %v362, %v555
        %557 = vmatprep.mubr.bf16.mxu0 0
        %558 = vmatmul.mubr.bf16.gmra.mrb[0].mxu0 %v460
        %v559 = vpop.f32.mrb[0].mxu0
        %v560 = vadd.f32 %v367, %v559
        %v561 = vpop.f32.mrb[0].mxu0
        %v562 = vadd.f32 %v367, %v561
        %v563 = vpop.f32.mrb[0].mxu0
        %v564 = vadd.f32 %v372, %v563
        %v565 = vpop.f32.mrb[0].mxu0
        %v566 = vadd.f32 %v372, %v565
        %567 = vmatprep.mubr.bf16.mxu0 0
        %568 = vmatmul.mubr.bf16.gmra.mrb[0].mxu0 %v463
        %v569 = vpop.f32.mrb[0].mxu0
        %v570 = vadd.f32 %v377, %v569
        %v571 = vpop.f32.mrb[0].mxu0
        %v572 = vadd.f32 %v377, %v571
        %v573 = vpop.f32.mrb[0].mxu0
        %v574 = vadd.f32 %v382, %v573
        %v575 = vpop.f32.mrb[0].mxu0
        %v576 = vadd.f32 %v382, %v575
        %577 = vmatprep.mubr.bf16.mxu0 0
        %578 = vmatmul.mubr.bf16.gmra.mrb[0].mxu0 %v466
        %v579 = vpop.f32.mrb[0].mxu0
        %v580 = vadd.f32 %v387, %v579
        %v581 = vpop.f32.mrb[0].mxu0
        %v582 = vadd.f32 %v387, %v581
        %v583 = vpop.f32.mrb[0].mxu0
        %v584 = vadd.f32 %v392, %v583
        %v585 = vpop.f32.mrb[0].mxu0
        %v586 = vadd.f32 %v392, %v585
        %587 = vdwg.mxu0
        %v588 = vmax.f32 %v510, 0.0
        %v589 = vmax.f32 %v512, 0.0
        %v590 = vmax.f32 %v514, 0.0
        %v591 = vmax.f32 %v516, 0.0
        %v592 = vmax.f32 %v520, 0.0
        %v593 = vmax.f32 %v522, 0.0
        %v594 = vmax.f32 %v524, 0.0
        %v595 = vmax.f32 %v526, 0.0
        %v596 = vmax.f32 %v530, 0.0
        %v597 = vmax.f32 %v532, 0.0
        %v598 = vmax.f32 %v534, 0.0
        %v599 = vmax.f32 %v536, 0.0
        %v600 = vmax.f32 %v540, 0.0
        %v601 = vmax.f32 %v542, 0.0
        %v602 = vmax.f32 %v544, 0.0
        %v603 = vmax.f32 %v546, 0.0
        %v604 = vmax.f32 %v550, 0.0
        %v605 = vmax.f32 %v552, 0.0
        %v606 = vmax.f32 %v554, 0.0
        %v607 = vmax.f32 %v556, 0.0
        %v608 = vmax.f32 %v560, 0.0
        %v609 = vmax.f32 %v562, 0.0
        %v610 = vmax.f32 %v564, 0.0
        %v611 = vmax.f32 %v566, 0.0
        %v612 = vmax.f32 %v570, 0.0
        %v613 = vmax.f32 %v572, 0.0
        %v614 = vmax.f32 %v574, 0.0
        %v615 = vmax.f32 %v576, 0.0
        %v616 = vmax.f32 %v580, 0.0
        %v617 = vmax.f32 %v582, 0.0
        %v618 = vmax.f32 %v584, 0.0
        %v619 = vmax.f32 %v586, 0.0
        %v620 = vld [vmem:[%s3] sm:$0xf]
        %v621 = vld [vmem:[%s3 + $0x4] sm:$0xf]
        %v622 = vld [vmem:[%s3 + $0x8] sm:$0xf]
        %v623 = vld [vmem:[%s3 + $0xc] sm:$0xf]
        %v624 = vld [vmem:[%s3 + $0x10] sm:$0xf]
        %v625 = vld [vmem:[%s3 + $0x14] sm:$0xf]
        %v626 = vld [vmem:[%s3 + $0x18] sm:$0xf]
        %v627 = vld [vmem:[%s3 + $0x1c] sm:$0xf]
        %v628 = vpack.c.bf16 %v590, %v588
        %v629 = vpack.c.bf16 %v591, %v589
        %v630 = vpack.c.bf16 %v594, %v592
        %v631 = vpack.c.bf16 %v595, %v593
        %v632 = vpack.c.bf16 %v598, %v596
        %v633 = vpack.c.bf16 %v599, %v597
        %v634 = vpack.c.bf16 %v602, %v600
        %v635 = vpack.c.bf16 %v603, %v601
        %v636 = vpack.c.bf16 %v606, %v604
        %v637 = vpack.c.bf16 %v607, %v605
        %v638 = vpack.c.bf16 %v610, %v608
        %v639 = vpack.c.bf16 %v611, %v609
        %v640 = vpack.c.bf16 %v614, %v612
        %v641 = vpack.c.bf16 %v615, %v613
        %v642 = vpack.c.bf16 %v618, %v616
        %v643 = vpack.c.bf16 %v619, %v617
        %v644 = vld [vmem:[%s4] sm:$0xff]
        %v645 = vld [vmem:[%s4 + $0x8] sm:$0xff]
        %v646 = vld [vmem:[%s4 + $0x10] sm:$0xff]
        %v647 = vld [vmem:[%s4 + $0x18] sm:$0xff]
        %v648 = vld [vmem:[%s4 + $0x20] sm:$0xff]
        %v649 = vld [vmem:[%s4 + $0x28] sm:$0xff]
        %v650 = vld [vmem:[%s4 + $0x30] sm:$0xff]
        %v651 = vld [vmem:[%s4 + $0x38] sm:$0xff]
        %653 = vset.pattern.permute.xlu0 0
        %654 = vperm.xlu0 %653, %v644
        %v655 = vpop.permute.xlu0 %654
        %658 = vset.pattern.permute.xlu0 0
        %659 = vperm.xlu0 %658, %v645
        %v660 = vpop.permute.xlu0 %659
        %663 = vset.pattern.permute.xlu0 0
        %664 = vperm.xlu0 %663, %v646
        %v665 = vpop.permute.xlu0 %664
        %668 = vset.pattern.permute.xlu0 0
        %669 = vperm.xlu0 %668, %v647
        %v670 = vpop.permute.xlu0 %669
        %673 = vset.pattern.permute.xlu0 0
        %674 = vperm.xlu0 %673, %v648
        %v675 = vpop.permute.xlu0 %674
        %678 = vset.pattern.permute.xlu0 0
        %679 = vperm.xlu0 %678, %v649
        %v680 = vpop.permute.xlu0 %679
        %683 = vset.pattern.permute.xlu0 0
        %684 = vperm.xlu0 %683, %v650
        %v685 = vpop.permute.xlu0 %684
        %688 = vset.pattern.permute.xlu0 0
        %689 = vperm.xlu0 %688, %v651
        %v690 = vpop.permute.xlu0 %689
        %v700 = vunpack.c.l.b16 %v620
        %v701 = vunpack.c.l.b16 %v621
        %v702 = vunpack.c.l.b16 %v622
        %v703 = vunpack.c.l.b16 %v623
        %v704 = vunpack.c.l.b16 %v624
        %v705 = vunpack.c.l.b16 %v625
        %v706 = vunpack.c.l.b16 %v626
        %v707 = vunpack.c.l.b16 %v627
        %v708 = vpack.c.b16 %v701, %v700
        %v709 = vpack.c.b16 %v703, %v702
        %v710 = vpack.c.b16 %v705, %v704
        %v711 = vpack.c.b16 %v707, %v706
        %716 = vmatprep.subr.bf16.mxu0 %v629
        %717 = vmatpush1.bf16.msra.mxu0 %v628
        %718 = vmatprep.subr.bf16.mxu0 %v631
        %719 = vmatpush1.bf16.msra.mxu0 %v630
        %720 = vmatprep.subr.bf16.mxu0 %v633
        %721 = vmatpush1.bf16.msra.mxu0 %v632
        %722 = vmatprep.subr.bf16.mxu0 %v635
        %723 = vmatpush1.bf16.msra.mxu0 %v634
        %724 = vmatprep.subr.bf16.mxu0 %v637
        %725 = vmatpush1.bf16.msra.mxu0 %v636
        %726 = vmatprep.subr.bf16.mxu0 %v639
        %727 = vmatpush1.bf16.msra.mxu0 %v638
        %728 = vmatprep.subr.bf16.mxu0 %v641
        %729 = vmatpush1.bf16.msra.mxu0 %v640
        %730 = vmatprep.subr.bf16.mxu0 %v643
        %731 = vmatpush1.bf16.msra.mxu0 %v642
        %732 = vmatprep.subr.bf16.mxu0 0
        %733 = vmatpush1.bf16.msra.mxu0 0
        %734 = vmatprep.subr.bf16.mxu0 0
        %735 = vmatpush1.bf16.msra.mxu0 0
        %736 = vmatprep.subr.bf16.mxu0 0
        %737 = vmatpush1.bf16.msra.mxu0 0
        %738 = vmatprep.subr.bf16.mxu0 0
        %739 = vmatpush1.bf16.msra.mxu0 0
        %740 = vmatprep.subr.bf16.mxu0 0
        %741 = vmatpush1.bf16.msra.mxu0 0
        %742 = vmatprep.subr.bf16.mxu0 0
        %743 = vmatpush1.bf16.msra.mxu0 0
        %744 = vmatprep.subr.bf16.mxu0 0
        %745 = vmatpush1.bf16.msra.mxu0 0
        %746 = vmatprep.subr.bf16.mxu0 0
        %747 = vmatpush1.bf16.msra.mxu0 0
        %748 = vmatprep.mubr.bf16.mxu0 0
        %749 = vmatmul.mubr.bf16.gmra.mrb[0].mxu0 %v708
        %v750 = vpop.f32.mrb[0].mxu0
        %v751 = vadd.f32 %v655, %v750
        %v752 = vpop.f32.mrb[0].mxu0
        %v753 = vadd.f32 %v655, %v752
        %v754 = vpop.f32.mrb[0].mxu0
        %v755 = vadd.f32 %v660, %v754
        %v756 = vpop.f32.mrb[0].mxu0
        %v757 = vadd.f32 %v660, %v756
        %758 = vmatprep.mubr.bf16.mxu0 0
        %759 = vmatmul.mubr.bf16.gmra.mrb[0].mxu0 %v709
        %v760 = vpop.f32.mrb[0].mxu0
        %v761 = vadd.f32 %v665, %v760
        %v762 = vpop.f32.mrb[0].mxu0
        %v763 = vadd.f32 %v665, %v762
        %v764 = vpop.f32.mrb[0].mxu0
        %v765 = vadd.f32 %v670, %v764
        %v766 = vpop.f32.mrb[0].mxu0
        %v767 = vadd.f32 %v670, %v766
        %768 = vmatprep.mubr.bf16.mxu0 0
        %769 = vmatmul.mubr.bf16.gmra.mrb[0].mxu0 %v710
        %v770 = vpop.f32.mrb[0].mxu0
        %v771 = vadd.f32 %v675, %v770
        %v772 = vpop.f32.mrb[0].mxu0
        %v773 = vadd.f32 %v675, %v772
        %v774 = vpop.f32.mrb[0].mxu0
        %v775 = vadd.f32 %v680, %v774
        %v776 = vpop.f32.mrb[0].mxu0
        %v777 = vadd.f32 %v680, %v776
        %778 = vmatprep.mubr.bf16.mxu0 0
        %779 = vmatmul.mubr.bf16.gmra.mrb[0].mxu0 %v711
        %v780 = vpop.f32.mrb[0].mxu0
        %v781 = vadd.f32 %v685, %v780
        %v782 = vpop.f32.mrb[0].mxu0
        %v783 = vadd.f32 %v685, %v782
        %v784 = vpop.f32.mrb[0].mxu0
        %v785 = vadd.f32 %v690, %v784
        %v786 = vpop.f32.mrb[0].mxu0
        %v787 = vadd.f32 %v690, %v786
        %788 = vdwg.mxu0
        %v789 = vmax.f32 %v751, 0.0
        %v790 = vmax.f32 %v753, 0.0
        %v791 = vmax.f32 %v755, 0.0
        %v792 = vmax.f32 %v757, 0.0
        %v793 = vmax.f32 %v761, 0.0
        %v794 = vmax.f32 %v763, 0.0
        %v795 = vmax.f32 %v765, 0.0
        %v796 = vmax.f32 %v767, 0.0
        %v797 = vmax.f32 %v771, 0.0
        %v798 = vmax.f32 %v773, 0.0
        %v799 = vmax.f32 %v775, 0.0
        %v800 = vmax.f32 %v777, 0.0
        %v801 = vmax.f32 %v781, 0.0
        %v802 = vmax.f32 %v783, 0.0
        %v803 = vmax.f32 %v785, 0.0
        %v804 = vmax.f32 %v787, 0.0
        %v805 = vld [vmem:[%s5] sm:$0xff]
        %v806 = vld [vmem:[%s5 + $0x8] sm:$0xff]
        %v807 = vld [vmem:[%s5 + $0x10] sm:$0xff]
        %v808 = vld [vmem:[%s5 + $0x18] sm:$0xff]
        %v809 = vld [vmem:[%s5 + $0x20] sm:$0xff]
        %v810 = vld [vmem:[%s5 + $0x28] sm:$0xff]
        %v811 = vld [vmem:[%s5 + $0x30] sm:$0xff]
        %v812 = vld [vmem:[%s5 + $0x38] sm:$0xff]
        %v813 = vld [vmem:[%s5 + $0x40] sm:$0xff]
        %v814 = vld [vmem:[%s5 + $0x48] sm:$0xff]
        %v815 = vld [vmem:[%s5 + $0x50] sm:$0xff]
        %v816 = vld [vmem:[%s5 + $0x58] sm:$0xff]
        %v817 = vld [vmem:[%s5 + $0x60] sm:$0xff]
        %v818 = vld [vmem:[%s5 + $0x68] sm:$0xff]
        %v819 = vld [vmem:[%s5 + $0x70] sm:$0xff]
        %v820 = vld [vmem:[%s5 + $0x78] sm:$0xff]
        %v821 = vmul.f32 %v789, %v805
        %v822 = vmul.f32 %v790, %v806
        %v823 = vmul.f32 %v791, %v807
        %v824 = vmul.f32 %v792, %v808
        %v825 = vmul.f32 %v793, %v809
        %v826 = vmul.f32 %v794, %v810
        %v827 = vmul.f32 %v795, %v811
        %v828 = vmul.f32 %v796, %v812
        %v829 = vmul.f32 %v797, %v813
        %v830 = vmul.f32 %v798, %v814
        %v831 = vmul.f32 %v799, %v815
        %v832 = vmul.f32 %v800, %v816
        %v833 = vmul.f32 %v801, %v817
        %v834 = vmul.f32 %v802, %v818
        %v835 = vmul.f32 %v803, %v819
        %v836 = vmul.f32 %v804, %v820
        %v837 = vadd.f32 %v821, %v823
        %v838 = vadd.f32 %v837, %v825
        %v839 = vadd.f32 %v838, %v827
        %v840 = vadd.f32 %v839, %v829
        %v841 = vadd.f32 %v840, %v831
        %v842 = vadd.f32 %v841, %v833
        %v843 = vadd.f32 %v842, %v835
        %v844 = vrot.slane %v843, 4
        %v845 = vadd.f32 %v843, %v844
        %v846 = vrot.slane %v845, 2
        %v847 = vadd.f32 %v845, %v846
        %v848 = vrot.slane %v847, 1
        %v849 = vadd.f32 %v847, %v848
        %v850 = vadd.f32 %v822, %v824
        %v851 = vadd.f32 %v850, %v826
        %v852 = vadd.f32 %v851, %v828
        %v853 = vadd.f32 %v852, %v830
        %v854 = vadd.f32 %v853, %v832
        %v855 = vadd.f32 %v854, %v834
        %v856 = vadd.f32 %v855, %v836
        %v857 = vrot.slane %v856, 4
        %v858 = vadd.f32 %v856, %v857
        %v859 = vrot.slane %v858, 2
        %v860 = vadd.f32 %v858, %v859
        %v861 = vrot.slane %v860, 1
        %v862 = vadd.f32 %v860, %v861
        %v863 = vld [vmem:[%s6] sm:$0x3]
        %v865 = vlaneseq
        %v866 = vshrl.u32 %v865, 7
        %v867 = vsub.s32 0, %v866
        %v868 = vrot.slane %v863, %v867
        %v869 = vlaneseq
        %v870 = vshrl.u32 %v869, 7
        %v871 = vsub.s32 1, %v870
        %v872 = vrot.slane %v863, %v871
        %v875 = vadd.f32 %v849, %v868
        %v876 = vadd.f32 %v862, %v872
        %v879 = vcombine.low %v875, %v876
        %v881 = vunpack.c.l.s4 1966171168
        %v882 = vunpack.c.0.s8 %v881
        %v883 = vlaneseq
        %v884 = vshrl.u32 %v883, 7
        %v885 = vsub.s32 %v882, %v884
        %v886 = vrot.slane %v879, %v885
        %v888 = vunpack.c.l.s4 1966171168
        %v889 = vunpack.c.0.s8 %v888
        %v890 = vlaneseq
        %v891 = vshrl.u32 %v890, 7
        %v892 = vsub.s32 %v889, %v891
        %v893 = vrot.slane %v886, %v892
        %v895 = vlaneseq
        %vm896 = vcmp.ge.s32.totalorder %v895, 0
        %vm897 = vcmp.lt.s32.totalorder %v895, 256
        %vm898 = vmand %vm896, %vm897
        %899 = vst.msk [vmem:[%s272] sm:$0x3] %vm898, %v893
        %s900 = sand.u32 %s181, 1
        %s901 = scalar_lea.sflag [#allocation3], %s900
        %s902 = sand.u32 %s181, 1
        %s903 = smul.addr %s902, 2
        %s904 = scalar_lea.vmem [#allocation2], %s903
        // Predicated region
        $region49: #{tpu_custom_call.1} parent=47 // pred_check
          %p905 = pneg %p191
        $region50: #{tpu_custom_call.1} parent=47 // pred_check_branch
          %907 = sbr.rel (%p905) target = $region52
        $region51: #{tpu_custom_call.1} parent=47 // pred_region
          %s908 = smul.u32 2, %s21
          %s910 = ssub.s32 32, 32
          %911 = vsyncadd %s901, %s910
          %s912 = smul.addr %s908, 16
          %s913 = scalar_lea.hbm %s7, %s912
          %s915 = sshll.u32 %s904, 4
          %s916 = int_to_ptr.vmem [resolvable:$true] %s915
          %918 = dma.vmem_to_hbm [thread:$0]  %s916, 32, %s913, %s901
        $region52: #{tpu_custom_call.1} parent=47 // pred_fallthru
          _
      $region48: #{tpu_custom_call.1} parent=5 // pred_fallthru
        _
      %p919 = scmp.le.s32.totalorder 2, %s16
      // Predicated region
      $region53: #{tpu_custom_call.1} parent=5 // pred_check
        %p920 = pneg %p919
      $region54: #{tpu_custom_call.1} parent=5 // pred_check_branch
        %922 = sbr.rel (%p920) target = $region56
      $region55: #{tpu_custom_call.1} parent=5 // pred_region
        %s923 = ssub.s32 %s16, 2
        // Predicated region
        $region57: #{tpu_custom_call.1} parent=55 // pred_check
          %p924 = pneg %p197
        $region58: #{tpu_custom_call.1} parent=55 // pred_check_branch
          %926 = sbr.rel (%p924) target = $region60
        $region59: #{tpu_custom_call.1} parent=55 // pred_region
          %s927 = sand.u32 %s182, 1
          %s928 = scalar_lea.sflag [#allocation3], %s927
          %s929 = sand.u32 %s182, 1
          %s930 = smul.addr %s929, 2
          %s931 = scalar_lea.vmem [#allocation2], %s930
          %932 = dma.done %s928, 32
        $region60: #{tpu_custom_call.1} parent=55 // pred_fallthru
          _
      $region56: #{tpu_custom_call.1} parent=5 // pred_fallthru
        _
    $region6: #{tpu_custom_call.1} parent=1 // loop_footer
      %s20 = sadd.s32 1, %s16
    $region7: #{tpu_custom_call.1} parent=1 // loop_footer_branch
      %15 = sbr.rel target = $region3
    $region8: #{tpu_custom_call.1} parent=1 // loop_exit
      _
    %933 = vsyncpa [#allocation3], 1
    %s934 = scalar_lea.sflag [#allocation3], 1
    %935 = vsyncpa %s934, 1

</llo_original>
